<compile_context>
chip_gen: v5e
topology: v5e:2x2
jax: 0.10.0
libtpu: 0.0.40
codegen_flags: <defaults>
</compile_context>

<pallas_src>
import jax
import jax.numpy as jnp
from jax.experimental import pallas as pl
from jax.experimental.pallas import tpu as pltpu

_LANE = 128
# Budget for the (output + target) f32 tiles, double-buffered by the pipeline.
_VMEM_TILE_BUDGET = 8 * 1024 * 1024


def _choose_spatial_tile(hw, co, ct):
    """Pick a lane-aligned spatial tile and the padded spatial extent."""
    hw_pad = pl.cdiv(hw, _LANE) * _LANE
    bytes_per_spatial = (co + ct) * 4 * 2          # f32, double-buffered
    max_tile = max(_LANE, (_VMEM_TILE_BUDGET // bytes_per_spatial) // _LANE * _LANE)
    if hw_pad <= max_tile:
        return hw_pad, hw_pad
    hw_pad = pl.cdiv(hw_pad, max_tile) * max_tile
    return hw_pad, max_tile


def _levelset_kernel(out_ref, tar_ref, loss_ref, s_to_acc, s_t2o_acc, s_o_acc):
    ti = pl.program_id(1)

    @pl.when(ti == 0)
    def _init():
        s_to_acc[...] = jnp.zeros_like(s_to_acc)
        s_t2o_acc[...] = jnp.zeros_like(s_t2o_acc)
        s_o_acc[...] = jnp.zeros_like(s_o_acc)

    o = out_ref[0].astype(jnp.float32)   # (Co, T) — spatial axis on lanes
    t = tar_ref[0].astype(jnp.float32)   # (Ct, T)

    # MXU matmuls contracting over the spatial axis (same transposed-RHS
    # pattern as flash attention's q·kᵀ).  fp32 contraction keeps the result
    # within the reference tolerance.
    s_to_acc[...] += jnp.einsum(
        "ct,jt->cj", o, t,
        precision=jax.lax.Precision.HIGHEST,
        preferred_element_type=jnp.float32)
    s_t2o_acc[...] += jnp.einsum(
        "ct,jt->cj", o, t * t,
        precision=jax.lax.Precision.HIGHEST,
        preferred_element_type=jnp.float32)
    # j-independent reduction: once per tile, on the otherwise-idle XLU.
    s_o_acc[...] += jnp.sum(o, axis=1, keepdims=True)

    @pl.when(ti == pl.num_programs(1) - 1)
    def _finalize():
        s_o = s_o_acc[...]            # (Co, 1)
        s_to = s_to_acc[...]          # (Co, Ct)
        s_t2o = s_t2o_acc[...]        # (Co, Ct)
        # NOTE: inf/NaN if sum_hw(o_c) == 0, identical to the PyTorch module.
        loss_b = jnp.sum(s_t2o - (s_to * s_to) / s_o)
        loss_ref[...] = jnp.full(loss_ref.shape, loss_b, dtype=loss_ref.dtype)


def levelset_loss(output, target):
    """Pallas implementation of levelsetLoss.forward.

    output: (B, Co, H, W); target: (B, Ct, H, W).  Returns scalar float32.
    """
    B, Co, H, W = output.shape
    Bt, Ct, Ht, Wt = target.shape
    assert (B, H, W) == (Bt, Ht, Wt), "output/target batch & spatial dims must match"

    hw = H * W
    o = output.reshape(B, Co, hw)
    t = target.reshape(B, Ct, hw)

    hw_pad, tile = _choose_spatial_tile(hw, Co, Ct)
    if hw_pad != hw:
        # Zero padding is exact: every reduced term carries a factor of `output`.
        o = jnp.pad(o, ((0, 0), (0, 0), (0, hw_pad - hw)))
        t = jnp.pad(t, ((0, 0), (0, 0), (0, hw_pad - hw)))
    n_tiles = hw_pad // tile

    partials = pl.pallas_call(
        _levelset_kernel,
        out_shape=jax.ShapeDtypeStruct((B, 8, _LANE), jnp.float32),
        grid_spec=pltpu.PrefetchScalarGridSpec(
            num_scalar_prefetch=0,
            grid=(B, n_tiles),
            in_specs=[
                # lane-dense (Co, tile) slab of output for batch b
                pl.BlockSpec((1, Co, tile), lambda b, ti: (b, 0, ti)),
                # all target channels for the same spatial tile
                pl.BlockSpec((1, Ct, tile), lambda b, ti: (b, 0, ti)),
            ],
            # Per-batch partial loss; block stays resident across the tile axis.
            out_specs=pl.BlockSpec((1, 8, _LANE), lambda b, ti: (b, 0, 0)),
            scratch_shapes=[
                pltpu.VMEM((Co, Ct), jnp.float32),   # s_to accumulator
                pltpu.VMEM((Co, Ct), jnp.float32),   # s_t2o accumulator
                pltpu.VMEM((Co, 1), jnp.float32),    # s_o accumulator
            ],
        ),
        compiler_params=pltpu.CompilerParams(
            # batch axis is independent (per-batch partial outputs) -> parallel;
            # spatial-tile axis carries the accumulator -> arbitrary.
            dimension_semantics=("parallel", "arbitrary"),
        ),
    )(o, t)

    return jnp.sum(partials[:, 0, 0])


def levelset_loss_ref(output, target):
    """Pure-JAX reference mirroring the PyTorch loop semantics."""
    B, Co, H, W = output.shape
    Ct = target.shape[1]
    loss = jnp.float32(0.0)
    for ich in range(Ct):
        t = target[:, ich:ich + 1]                               # (B, 1, H, W)
        s_to = jnp.sum(t * output, axis=(2, 3))                  # (B, Co)
        s_o = jnp.sum(output, axis=(2, 3))                       # (B, Co)
        pcentroid = (s_to / s_o).reshape(B, Co, 1, 1)
        plevel = t - pcentroid
        loss = loss + jnp.sum(plevel * plevel * output)
    return loss


if __name__ == "__main__":
    key = jax.random.PRNGKey(0)
    k1, k2 = jax.random.split(key)

    B, Co, Ct, H, W = 2, 4, 4, 16, 16
    # output behaves like softmax probabilities in the original usage
    # (keeps the spatial sum away from zero for the centroid division).
    logits = jax.random.normal(k1, (B, Co, H, W), dtype=jnp.float32)
    output = jax.nn.softmax(logits, axis=1)
    target = jax.random.uniform(k2, (B, Ct, H, W), dtype=jnp.float32)

    loss = jax.block_until_ready(levelset_loss(output, target))
    ref = jax.block_until_ready(levelset_loss_ref(output, target))

    assert jnp.allclose(loss, ref, rtol=1e-4, atol=1e-4), (loss, ref)
    print("KERNEL_OK")
</pallas_src>

<mosaic_0001>
module attributes {stable_mosaic.version = 11 : i64} {
  func.func @_levelset_kernel(%arg0: i32, %arg1: i32, %arg2: memref<1x4x256xf32, #tpu.memory_space<vmem>>, %arg3: memref<1x4x256xf32, #tpu.memory_space<vmem>>, %arg4: memref<1x8x128xf32, #tpu.memory_space<vmem>>, %arg5: memref<4x4xf32, #tpu.memory_space<vmem>>, %arg6: memref<4x4xf32, #tpu.memory_space<vmem>>, %arg7: memref<4x1xf32, #tpu.memory_space<vmem>>) attributes {dimension_semantics = [#tpu.dimension_semantics<parallel>, #tpu.dimension_semantics<arbitrary>], iteration_bounds = array<i64: 2, 1>, scalar_prefetch = 0 : i64, scratch_operands = 3 : i64, tpu.core_type = #tpu.core_type<tc>, window_params = [{transform_indices = @transform_0, window_bounds = array<i64: 1, 4, 256>}, {transform_indices = @transform_1, window_bounds = array<i64: 1, 4, 256>}, {transform_indices = @transform_2, window_bounds = array<i64: 1, 8, 128>}]} {
    %c0_i32 = arith.constant 0 : i32
    %0 = arith.cmpi eq, %arg1, %c0_i32 : i32
    %1 = arith.extui %0 : i1 to i32
    %c0_i32_0 = arith.constant 0 : i32
    %2 = arith.cmpi ne, %1, %c0_i32_0 : i32
    scf.if %2 {
      %cst_22 = arith.constant 0.000000e+00 : f32
      %24 = vector.broadcast %cst_22 : f32 to vector<4x4xf32>
      %c0_23 = arith.constant 0 : index
      %c0_24 = arith.constant 0 : index
      %25 = vector.load %arg5[%c0_23, %c0_24] : memref<4x4xf32, #tpu.memory_space<vmem>>, vector<4x4xf32>
      tpu.vector_store %arg5[%c0_23, %c0_24], %24 {strides = array<i32>} : memref<4x4xf32, #tpu.memory_space<vmem>>, vector<4x4xf32>,
      %cst_25 = arith.constant 0.000000e+00 : f32
      %26 = vector.broadcast %cst_25 : f32 to vector<4x4xf32>
      %c0_26 = arith.constant 0 : index
      %c0_27 = arith.constant 0 : index
      %27 = vector.load %arg6[%c0_26, %c0_27] : memref<4x4xf32, #tpu.memory_space<vmem>>, vector<4x4xf32>
      tpu.vector_store %arg6[%c0_26, %c0_27], %26 {strides = array<i32>} : memref<4x4xf32, #tpu.memory_space<vmem>>, vector<4x4xf32>,
      %cst_28 = arith.constant 0.000000e+00 : f32
      %28 = vector.broadcast %cst_28 : f32 to vector<4x1xf32>
      %c0_29 = arith.constant 0 : index
      %c0_30 = arith.constant 0 : index
      %29 = vector.load %arg7[%c0_29, %c0_30] : memref<4x1xf32, #tpu.memory_space<vmem>>, vector<4x1xf32>
      tpu.vector_store %arg7[%c0_29, %c0_30], %28 {strides = array<i32>} : memref<4x1xf32, #tpu.memory_space<vmem>>, vector<4x1xf32>,
    } else {
    }
    %c0 = arith.constant 0 : index
    %c0_1 = arith.constant 0 : index
    %c0_2 = arith.constant 0 : index
    %3 = vector.load %arg2[%c0, %c0_1, %c0_2] : memref<1x4x256xf32, #tpu.memory_space<vmem>>, vector<1x4x256xf32>
    %4 = vector.shape_cast %3 : vector<1x4x256xf32> to vector<4x256xf32>
    %c0_3 = arith.constant 0 : index
    %c0_4 = arith.constant 0 : index
    %c0_5 = arith.constant 0 : index
    %5 = vector.load %arg3[%c0_3, %c0_4, %c0_5] : memref<1x4x256xf32, #tpu.memory_space<vmem>>, vector<1x4x256xf32>
    %6 = vector.shape_cast %5 : vector<1x4x256xf32> to vector<4x256xf32>
    %c0_6 = arith.constant 0 : index
    %c0_7 = arith.constant 0 : index
    %7 = vector.load %arg5[%c0_6, %c0_7] : memref<4x4xf32, #tpu.memory_space<vmem>>, vector<4x4xf32>
    "tpu.trace_start"() <{level = 10 : i32, message = "ct,jt->cj"}> : () -> ()
    %cst = arith.constant dense<0.000000e+00> : vector<4x4xf32>
    %8 = tpu.matmul %4, %6, %cst {dimension_numbers = #tpu.dot_dimension_numbers<[1], [1], [0], [0], [0, 0, 1, 0], [], []>, precision = #tpu.contract_precision<fp32>} : vector<4x256xf32>, vector<4x256xf32>, vector<4x4xf32> -> vector<4x4xf32>
    "tpu.trace_stop"() : () -> ()
    %9 = arith.addf %7, %8 : vector<4x4xf32>
    %c0_8 = arith.constant 0 : index
    %c0_9 = arith.constant 0 : index
    %10 = vector.load %arg5[%c0_8, %c0_9] : memref<4x4xf32, #tpu.memory_space<vmem>>, vector<4x4xf32>
    tpu.vector_store %arg5[%c0_8, %c0_9], %9 {strides = array<i32>} : memref<4x4xf32, #tpu.memory_space<vmem>>, vector<4x4xf32>,
    %c0_10 = arith.constant 0 : index
    %c0_11 = arith.constant 0 : index
    %11 = vector.load %arg6[%c0_10, %c0_11] : memref<4x4xf32, #tpu.memory_space<vmem>>, vector<4x4xf32>
    %12 = arith.mulf %6, %6 : vector<4x256xf32>
    "tpu.trace_start"() <{level = 10 : i32, message = "ct,jt->cj"}> : () -> ()
    %cst_12 = arith.constant dense<0.000000e+00> : vector<4x4xf32>
    %13 = tpu.matmul %4, %12, %cst_12 {dimension_numbers = #tpu.dot_dimension_numbers<[1], [1], [0], [0], [0, 0, 1, 0], [], []>, precision = #tpu.contract_precision<fp32>} : vector<4x256xf32>, vector<4x256xf32>, vector<4x4xf32> -> vector<4x4xf32>
    "tpu.trace_stop"() : () -> ()
    %14 = arith.addf %11, %13 : vector<4x4xf32>
    %c0_13 = arith.constant 0 : index
    %c0_14 = arith.constant 0 : index
    %15 = vector.load %arg6[%c0_13, %c0_14] : memref<4x4xf32, #tpu.memory_space<vmem>>, vector<4x4xf32>
    tpu.vector_store %arg6[%c0_13, %c0_14], %14 {strides = array<i32>} : memref<4x4xf32, #tpu.memory_space<vmem>>, vector<4x4xf32>,
    %c0_15 = arith.constant 0 : index
    %c0_16 = arith.constant 0 : index
    %16 = vector.load %arg7[%c0_15, %c0_16] : memref<4x1xf32, #tpu.memory_space<vmem>>, vector<4x1xf32>
    %cst_17 = arith.constant dense<0.000000e+00> : vector<4xf32>
    %17 = vector.multi_reduction <add>, %4, %cst_17 [1] : vector<4x256xf32> to vector<4xf32>
    %18 = vector.shape_cast %17 : vector<4xf32> to vector<4x1xf32>
    %19 = arith.addf %16, %18 : vector<4x1xf32>
    %c0_18 = arith.constant 0 : index
    %c0_19 = arith.constant 0 : index
    %20 = vector.load %arg7[%c0_18, %c0_19] : memref<4x1xf32, #tpu.memory_space<vmem>>, vector<4x1xf32>
    tpu.vector_store %arg7[%c0_18, %c0_19], %19 {strides = array<i32>} : memref<4x1xf32, #tpu.memory_space<vmem>>, vector<4x1xf32>,
    %c0_i32_20 = arith.constant 0 : i32
    %21 = arith.cmpi eq, %arg1, %c0_i32_20 : i32
    %22 = arith.extui %21 : i1 to i32
    %c0_i32_21 = arith.constant 0 : i32
    %23 = arith.cmpi ne, %22, %c0_i32_21 : i32
    scf.if %23 {
      %c0_22 = arith.constant 0 : index
      %c0_23 = arith.constant 0 : index
      %24 = vector.load %arg7[%c0_22, %c0_23] : memref<4x1xf32, #tpu.memory_space<vmem>>, vector<4x1xf32>
      %c0_24 = arith.constant 0 : index
      %c0_25 = arith.constant 0 : index
      %25 = vector.load %arg5[%c0_24, %c0_25] : memref<4x4xf32, #tpu.memory_space<vmem>>, vector<4x4xf32>
      %c0_26 = arith.constant 0 : index
      %c0_27 = arith.constant 0 : index
      %26 = vector.load %arg6[%c0_26, %c0_27] : memref<4x4xf32, #tpu.memory_space<vmem>>, vector<4x4xf32>
      %27 = arith.mulf %25, %25 : vector<4x4xf32>
      %28 = vector.broadcast %24 : vector<4x1xf32> to vector<4x4xf32>
      %29 = arith.divf %27, %28 : vector<4x4xf32>
      %30 = arith.subf %26, %29 : vector<4x4xf32>
      %31 = vector.shape_cast %30 : vector<4x4xf32> to vector<1x4x4xf32>
      %cst_28 = arith.constant dense<0.000000e+00> : vector<1xf32>
      %32 = vector.multi_reduction <add>, %31, %cst_28 [1, 2] : vector<1x4x4xf32> to vector<1xf32>
      %33 = vector.shape_cast %32 : vector<1xf32> to vector<1x1x1xf32>
      %34 = vector.extract %33[0, 0, 0] : f32 from vector<1x1x1xf32>
      %35 = vector.broadcast %34 : f32 to vector<1x8x128xf32>
      %c0_29 = arith.constant 0 : index
      %c0_30 = arith.constant 0 : index
      %c0_31 = arith.constant 0 : index
      %36 = vector.load %arg4[%c0_29, %c0_30, %c0_31] : memref<1x8x128xf32, #tpu.memory_space<vmem>>, vector<1x8x128xf32>
      tpu.vector_store %arg4[%c0_29, %c0_30, %c0_31], %35 {strides = array<i32>} : memref<1x8x128xf32, #tpu.memory_space<vmem>>, vector<1x8x128xf32>,
    } else {
    }
    return
  }
  func.func @transform_0(%arg0: i32, %arg1: i32) -> (i32, i32, i32) {
    %c0_i32 = arith.constant 0 : i32
    %c0_i32_0 = arith.constant 0 : i32
    return %arg0, %c0_i32, %arg1 : i32, i32, i32
  }
  func.func @transform_1(%arg0: i32, %arg1: i32) -> (i32, i32, i32) {
    %c0_i32 = arith.constant 0 : i32
    %c0_i32_0 = arith.constant 0 : i32
    return %arg0, %c0_i32, %arg1 : i32, i32, i32
  }
  func.func @transform_2(%arg0: i32, %arg1: i32) -> (i32, i32, i32) {
    %c0_i32 = arith.constant 0 : i32
    %c0_i32_0 = arith.constant 0 : i32
    %c0_i32_1 = arith.constant 0 : i32
    return %arg0, %c0_i32, %c0_i32_0 : i32, i32, i32
  }
}

</mosaic_0001>

<llo_original>
// kernel: tpu_custom_call.1
$region0: #{tpu_custom_call.1}
  #allocation0 [shape = 'u32[]', space=smem, size = 0x4, offset = 0x4, fixed_abs, tag = 'smem constant byte address 0x4 - core index']
  #allocation1 [shape = 'u32[72,128]{1,0:T(1,128)}', space=vmem, size = 0x9000, scoped, tag = 'internal scratch']
  #allocation2 [shape = 'f32[4,4]{1,0:T(4,128)}', space=vmem, size = 0x800, scoped, tag = 'scratch operand']
  #allocation3 [shape = 'f32[4,4]{1,0:T(4,128)}', space=vmem, size = 0x800, scoped, tag = 'scratch operand']
  #allocation4 [shape = 'f32[4,1]{1,0:T(4,128)}', space=vmem, size = 0x800, scoped, tag = 'scratch operand']
  %s0 = inlined_call_operand.hbm [shape: f32[2,4,256], index: 0, kind: input, shape index: {}]
  %s1 = inlined_call_operand.hbm [shape: f32[2,4,256], index: 1, kind: input, shape index: {}]
  %s2 = inlined_call_operand.hbm [shape: f32[2,8,128], index: 2, kind: output, shape index: {}]
  %s3 = sld [smem:[#allocation0]]
  $region57: #{tpu_custom_call.1} parent=0
    _
  %s5 = ssub.s32 1, %s3
  %s6 = scalar_select 0, %s5, %s3
  $region1: #{tpu_custom_call.1} parent=0
    #allocation5 [shape = 'u8[8192]{0}', space=vmem, size = 0x2000, scoped, tag = 'input window, operand 0']
    #allocation6 [shape = 's32[2]{0}', space=sflag, size = 0x8, scoped, tag = 'scoped memory for tpu_custom_call.1']
    #allocation7 [shape = 's32[2]{0}', space=sflag, size = 0x8, scoped, tag = 'scoped memory for tpu_custom_call.1']
    #allocation8 [shape = 'u8[8192]{0}', space=vmem, size = 0x2000, scoped, tag = 'input window, operand 1']
    #allocation9 [shape = 's32[2]{0}', space=sflag, size = 0x8, scoped, tag = 'scoped memory for tpu_custom_call.1']
    #allocation10 [shape = 'u8[8192]{0}', space=vmem, size = 0x2000, scoped, tag = 'output window, operand 0']
    %7 = vsyncpa [#allocation6], 0
    %s8 = scalar_lea.sflag [#allocation6], 1
    %9 = vsyncpa %s8, 0
    %10 = vsyncpa [#allocation9], 0
    %s11 = scalar_lea.sflag [#allocation9], 1
    %12 = vsyncpa %s11, 0
    %13 = vsyncpa [#allocation7], 0
    %s14 = scalar_lea.sflag [#allocation7], 1
    %15 = vsyncpa %s14, 0
    loop: start=0, step=1, limit=4
    $region2: #{tpu_custom_call.1} parent=1 // loop_pre_header
      _
    $region3: #{tpu_custom_call.1} parent=1 // loop_header
      %s17 = sphi 0, %s21
      %p18 = scmp.ge.s32.totalorder %s17, 4
      %s24 = sphi 0, %s36
      %s25 = sphi 0, %s32
      %s26 = sphi 0, %s24
      %s27 = sphi 0, %s25
      %s28 = sphi 0, %s26
      %s29 = sphi 0, %s27
      %s41 = sphi 0, %s43
      %s44 = sphi 0, %s41
      %s45 = sphi 0, %s44
      %s61 = sphi 0, %s45
      %s69 = sphi 0, %s71
      %s72 = sphi 0, %s69
      %s73 = sphi 0, %s72
      %s89 = sphi 0, %s73
      %s95 = sphi 0, %s97
      %s98 = sphi 0, %s95
      %s99 = sphi 0, %s98
      %s115 = sphi 0, %s99
    $region4: #{tpu_custom_call.1} parent=1 // loop_header_branch
      %20 = sbr.rel (%p18) target = $region8
    $region5: #{tpu_custom_call.1} parent=1 // loop_body
      %s22 = ssub.s32 %s17, 1
      %s23 = ssub.s32 %s17, 2
      %s30 = sadd.s32 1, %s25
      %p31 = scmp.ge.s32.totalorder %s30, 1
      %s32 = scalar_select %p31, 0, %s30
      %s33 = sadd.s32 1, %s24
      %s34 = scalar_select %p31, %s33, %s24
      %p35 = scmp.ge.s32.totalorder %s34, 2
      %s36 = scalar_select %p35, 0, %s34
      %s37 = ssub.s32 %s24, %s36
      %s38 = ssub.s32 %s25, %s32
      %s39 = sor.u32 %s37, %s38
      %p40 = scmp.eq.s32.totalorder %s39, 0
      %s42 = sadd.s32 %s41, 1
      %s43 = scalar_select %p40, %s41, %s42
      %p46 = pneg %p40
      %p47 = scmp.eq.s32.totalorder %s17, 1
      %p48 = por %p46, %p47
      %p49 = scmp.ne.s32.totalorder %s41, %s44
      %p50 = scmp.eq.s32.totalorder %s17, 0
      %p51 = por %p49, %p50
      %p52 = scmp.ne.s32.totalorder %s41, %s44
      %p53 = scmp.eq.s32.totalorder %s22, 1
      %p54 = por %p52, %p53
      %p55 = scmp.ne.s32.totalorder %s44, %s45
      %p56 = scmp.eq.s32.totalorder %s22, 0
      %p57 = por %p55, %p56
      %p58 = scmp.ne.s32.totalorder %s44, %s45
      %p59 = scmp.eq.s32.totalorder %s23, 1
      %p60 = por %p58, %p59
      %p62 = scmp.ne.s32.totalorder %s45, %s61
      %p63 = scmp.eq.s32.totalorder %s23, 0
      %p64 = por %p62, %p63
      %s65 = ssub.s32 %s24, %s36
      %s66 = ssub.s32 %s25, %s32
      %s67 = sor.u32 %s65, %s66
      %p68 = scmp.eq.s32.totalorder %s67, 0
      %s70 = sadd.s32 %s69, 1
      %s71 = scalar_select %p68, %s69, %s70
      %p74 = pneg %p68
      %p75 = scmp.eq.s32.totalorder %s17, 1
      %p76 = por %p74, %p75
      %p77 = scmp.ne.s32.totalorder %s69, %s72
      %p78 = scmp.eq.s32.totalorder %s17, 0
      %p79 = por %p77, %p78
      %p80 = scmp.ne.s32.totalorder %s69, %s72
      %p81 = scmp.eq.s32.totalorder %s22, 1
      %p82 = por %p80, %p81
      %p83 = scmp.ne.s32.totalorder %s72, %s73
      %p84 = scmp.eq.s32.totalorder %s22, 0
      %p85 = por %p83, %p84
      %p86 = scmp.ne.s32.totalorder %s72, %s73
      %p87 = scmp.eq.s32.totalorder %s23, 1
      %p88 = por %p86, %p87
      %p90 = scmp.ne.s32.totalorder %s73, %s89
      %p91 = scmp.eq.s32.totalorder %s23, 0
      %p92 = por %p90, %p91
      %s93 = ssub.s32 %s24, %s36
      %p94 = scmp.eq.s32.totalorder %s93, 0
      %s96 = sadd.s32 %s95, 1
      %s97 = scalar_select %p94, %s95, %s96
      %p100 = pneg %p94
      %p101 = scmp.eq.s32.totalorder %s17, 1
      %p102 = por %p100, %p101
      %p103 = scmp.ne.s32.totalorder %s95, %s98
      %p104 = scmp.eq.s32.totalorder %s17, 0
      %p105 = por %p103, %p104
      %p106 = scmp.ne.s32.totalorder %s95, %s98
      %p107 = scmp.eq.s32.totalorder %s22, 1
      %p108 = por %p106, %p107
      %p109 = scmp.ne.s32.totalorder %s98, %s99
      %p110 = scmp.eq.s32.totalorder %s22, 0
      %p111 = por %p109, %p110
      %p112 = scmp.ne.s32.totalorder %s98, %s99
      %p113 = scmp.eq.s32.totalorder %s23, 1
      %p114 = por %p112, %p113
      %p116 = scmp.ne.s32.totalorder %s99, %s115
      %p117 = scmp.eq.s32.totalorder %s23, 0
      %p118 = por %p116, %p117
      %p119 = scmp.le.s32.totalorder 1, %s17
      %p120 = scmp.lt.s32.totalorder %s17, 3
      %p121 = pnand %p119, %p120
      %p122 = pneg %p121
      // Predicated region
      $region9: #{tpu_custom_call.1} parent=5 // pred_check
        _
      $region10: #{tpu_custom_call.1} parent=5 // pred_check_branch
        %124 = sbr.rel (%p121) target = $region12
      $region11: #{tpu_custom_call.1} parent=5 // pred_region
        %s125 = ssub.s32 %s17, 1
      $region12: #{tpu_custom_call.1} parent=5 // pred_fallthru
        _
      %p126 = scmp.lt.s32.totalorder %s17, 2
      // Predicated region
      $region13: #{tpu_custom_call.1} parent=5 // pred_check
        %p127 = pneg %p126
      $region14: #{tpu_custom_call.1} parent=5 // pred_check_branch
        %129 = sbr.rel (%p127) target = $region16
      $region15: #{tpu_custom_call.1} parent=5 // pred_region
        // Predicated region
        $region17: #{tpu_custom_call.1} parent=15 // pred_check
          %p130 = pneg %p51
        $region18: #{tpu_custom_call.1} parent=15 // pred_check_branch
          %132 = sbr.rel (%p130) target = $region20
        $region19: #{tpu_custom_call.1} parent=15 // pred_region
          %s133 = sand.u32 %s41, 1
          %s134 = scalar_lea.sflag [#allocation6], %s133
          %s135 = sand.u32 %s41, 1
          %s136 = smul.addr %s135, 8
          %s137 = scalar_lea.vmem [#allocation5], %s136
          %s138 = smul.u32 2, %s25
          %140 = vsyncadd %s134, 0
          %s141 = smul.addr %s24, 2
          %s142 = sadd.s32 %s138, %s141
          %s143 = smul.addr %s142, 4
          %s144 = scalar_lea.hbm %s0, %s143
          %s146 = sshll.u32 %s144, 4
          %s147 = int_to_ptr.hbm [resolvable:$true] %s146
          %s148 = sshll.u32 %s137, 4
          %s149 = int_to_ptr.vmem [resolvable:$true] %s148
          %151 = dma.hbm_to_vmem [thread:$0]  %s147, 128, %s149, %s134
        $region20: #{tpu_custom_call.1} parent=15 // pred_fallthru
          _
        // Predicated region
        $region21: #{tpu_custom_call.1} parent=15 // pred_check
          %p152 = pneg %p79
        $region22: #{tpu_custom_call.1} parent=15 // pred_check_branch
          %154 = sbr.rel (%p152) target = $region24
        $region23: #{tpu_custom_call.1} parent=15 // pred_region
          %s155 = sand.u32 %s69, 1
          %s156 = scalar_lea.sflag [#allocation9], %s155
          %s157 = sand.u32 %s69, 1
          %s158 = smul.addr %s157, 8
          %s159 = scalar_lea.vmem [#allocation8], %s158
          %s160 = smul.u32 2, %s25
          %162 = vsyncadd %s156, 0
          %s163 = smul.addr %s24, 2
          %s164 = sadd.s32 %s160, %s163
          %s165 = smul.addr %s164, 4
          %s166 = scalar_lea.hbm %s1, %s165
          %s168 = sshll.u32 %s166, 4
          %s169 = int_to_ptr.hbm [resolvable:$true] %s168
          %s170 = sshll.u32 %s159, 4
          %s171 = int_to_ptr.vmem [resolvable:$true] %s170
          %173 = dma.hbm_to_vmem [thread:$0]  %s169, 128, %s171, %s156
        $region24: #{tpu_custom_call.1} parent=15 // pred_fallthru
          _
      $region16: #{tpu_custom_call.1} parent=5 // pred_fallthru
        _
      %p174 = scmp.le.s32.totalorder 1, %s17
      %p175 = scmp.lt.s32.totalorder %s17, 3
      %p176 = pnand %p174, %p175
      %p177 = pneg %p176
      // Predicated region
      $region25: #{tpu_custom_call.1} parent=5 // pred_check
        _
      $region26: #{tpu_custom_call.1} parent=5 // pred_check_branch
        %179 = sbr.rel (%p176) target = $region28
      $region27: #{tpu_custom_call.1} parent=5 // pred_region
        %s180 = ssub.s32 %s17, 1
        %s181 = sand.u32 %s44, 1
        %s182 = scalar_lea.sflag [#allocation6], %s181
        %s183 = sand.u32 %s44, 1
        %s184 = smul.addr %s183, 8
        %s185 = scalar_lea.vmem [#allocation5], %s184
        // Predicated region
        $region29: #{tpu_custom_call.1} parent=27 // pred_check
          %p186 = pneg %p57
        $region30: #{tpu_custom_call.1} parent=27 // pred_check_branch
          %188 = sbr.rel (%p186) target = $region32
        $region31: #{tpu_custom_call.1} parent=27 // pred_region
          %190 = dma.done %s182, 128
        $region32: #{tpu_custom_call.1} parent=27 // pred_fallthru
          _
        %s191 = sand.u32 %s72, 1
        %s192 = scalar_lea.sflag [#allocation9], %s191
        %s193 = sand.u32 %s72, 1
        %s194 = smul.addr %s193, 8
        %s195 = scalar_lea.vmem [#allocation8], %s194
        // Predicated region
        $region33: #{tpu_custom_call.1} parent=27 // pred_check
          %p196 = pneg %p85
        $region34: #{tpu_custom_call.1} parent=27 // pred_check_branch
          %198 = sbr.rel (%p196) target = $region36
        $region35: #{tpu_custom_call.1} parent=27 // pred_region
          %200 = dma.done %s192, 128
        $region36: #{tpu_custom_call.1} parent=27 // pred_fallthru
          _
        %s201 = sand.u32 %s44, 1
        %s202 = scalar_lea.sflag [#allocation6], %s201
        %s203 = sand.u32 %s44, 1
        %s204 = smul.addr %s203, 8
        %s205 = scalar_lea.vmem [#allocation5], %s204
        %p206 = pneg %p57
        %p207 = pneg %p54
        %s208 = sand.u32 %s72, 1
        %s209 = scalar_lea.sflag [#allocation9], %s208
        %s210 = sand.u32 %s72, 1
        %s211 = smul.addr %s210, 8
        %s212 = scalar_lea.vmem [#allocation8], %s211
        %p213 = pneg %p85
        %p214 = pneg %p82
        %p215 = pneg %p111
        %p216 = pneg %p108
        %s217 = sand.u32 %s98, 1
        %s218 = scalar_lea.sflag [#allocation7], %s217
        %s219 = sand.u32 %s98, 1
        %s220 = smul.addr %s219, 8
        %s221 = scalar_lea.vmem [#allocation10], %s220
        %s222 = smul.u32 2, %s27
        %s223 = smul.u32 2, %s27
        %p224 = scmp.eq.s32.totalorder %s27, 0
        // Predicated region
        $region37: #{tpu_custom_call.1} parent=27 // pred_check
          %p225 = pneg %p224
        $region38: #{tpu_custom_call.1} parent=27 // pred_check_branch
          %227 = sbr.rel (%p225) target = $region40
        $region39: #{tpu_custom_call.1} parent=27 // pred_region
          %vm228 = vcmask 27648
          %229 = vst.msk [vmem:[#allocation2] sm:$0xf] %vm228, 0.0
          %230 = vst.msk [vmem:[#allocation3] sm:$0xf] %vm228, 0.0
          %vm231 = vcmask 3072
          %232 = vst.msk [vmem:[#allocation4] sm:$0xf] %vm231, 0.0
        $region40: #{tpu_custom_call.1} parent=27 // pred_fallthru
          _
        %v233 = vld [vmem:[%s185] sm:$0xff]
        %v234 = vld [vmem:[%s195] sm:$0xff]
        %v235 = vld [vmem:[#allocation2] sm:$0xf]
        %237 = vst [vmem:[#allocation1] ss:$2 sm:$0xff] %v233
        %v238 = vld.sshfl [vmem:[#allocation1] sm:$0xff pattern:$0x75316420]
        %v239 = vld.sshfl [vmem:[#allocation1 + $0x8] sm:$0xff pattern:$0x75316420]
        %243 = vst [vmem:[#allocation1] ss:$2 sm:$0xff] %v234
        %v244 = vld.sshfl [vmem:[#allocation1] sm:$0xff pattern:$0x75316420]
        %v245 = vld.sshfl [vmem:[#allocation1 + $0x8] sm:$0xff pattern:$0x75316420]
        %248 = vmatpush.xpose.msra.mxu0 0.0
        %249 = vmatpush.xpose.msra.mxu0 0.0
        %250 = vmatpush.xpose.msra.mxu0 0.0
        %251 = vmatpush.xpose.msra.mxu0 0.0
        %252 = vmatpush.xpose.msra.mxu0 0.0
        %253 = vmatpush.xpose.msra.mxu0 0.0
        %254 = vmatpush.xpose.msra.mxu0 0.0
        %255 = vmatpush.xpose.msra.mxu0 0.0
        %256 = vmatpush.xpose.msra.mxu0 0.0
        %257 = vmatpush.xpose.msra.mxu0 0.0
        %258 = vmatpush.xpose.msra.mxu0 0.0
        %259 = vmatpush.xpose.msra.mxu0 0.0
        %260 = vmatpush.xpose.msra.mxu0 0.0
        %261 = vmatpush.xpose.msra.mxu0 0.0
        %262 = vmatpush.xpose.msra.mxu0 0.0
        %v263 = vand.u32 %v244, 4294901760
        %264 = vmatpush.xpose.msra.mxu0 %v263
        %v265 = vand.u32 %v238, 4294901760
        %v266 = vsub.f32 %v238, %v265
        %v267 = vand.u32 %v266, 4294901760
        %v268 = vsub.f32 %v266, %v267
        %v269 = vand.u32 %v268, 4294901760
        %270 = vmatmul.f32.gmra.mxu0 %v269
        %v271 = vpop.f32.mrf.mxu0
        %v272 = vadd.f32 0.0, %v271
        %273 = vdwg.mxu0
        %274 = vmatpush.xpose.msra.mxu0 0.0
        %275 = vmatpush.xpose.msra.mxu0 0.0
        %276 = vmatpush.xpose.msra.mxu0 0.0
        %277 = vmatpush.xpose.msra.mxu0 0.0
        %278 = vmatpush.xpose.msra.mxu0 0.0
        %279 = vmatpush.xpose.msra.mxu0 0.0
        %280 = vmatpush.xpose.msra.mxu0 0.0
        %281 = vmatpush.xpose.msra.mxu0 0.0
        %282 = vmatpush.xpose.msra.mxu0 0.0
        %283 = vmatpush.xpose.msra.mxu0 0.0
        %284 = vmatpush.xpose.msra.mxu0 0.0
        %285 = vmatpush.xpose.msra.mxu0 0.0
        %286 = vmatpush.xpose.msra.mxu0 0.0
        %287 = vmatpush.xpose.msra.mxu0 0.0
        %288 = vmatpush.xpose.msra.mxu0 0.0
        %v289 = vand.u32 %v244, 4294901760
        %v290 = vsub.f32 %v244, %v289
        %v291 = vand.u32 %v290, 4294901760
        %v292 = vsub.f32 %v290, %v291
        %v293 = vand.u32 %v292, 4294901760
        %294 = vmatpush.xpose.msra.mxu0 %v293
        %v295 = vand.u32 %v238, 4294901760
        %296 = vmatmul.f32.gmra.mxu0 %v295
        %v297 = vpop.f32.mrf.mxu0
        %v298 = vadd.f32 %v272, %v297
        %299 = vdwg.mxu0
        %300 = vmatpush.xpose.msra.mxu0 0.0
        %301 = vmatpush.xpose.msra.mxu0 0.0
        %302 = vmatpush.xpose.msra.mxu0 0.0
        %303 = vmatpush.xpose.msra.mxu0 0.0
        %304 = vmatpush.xpose.msra.mxu0 0.0
        %305 = vmatpush.xpose.msra.mxu0 0.0
        %306 = vmatpush.xpose.msra.mxu0 0.0
        %307 = vmatpush.xpose.msra.mxu0 0.0
        %308 = vmatpush.xpose.msra.mxu0 0.0
        %309 = vmatpush.xpose.msra.mxu0 0.0
        %310 = vmatpush.xpose.msra.mxu0 0.0
        %311 = vmatpush.xpose.msra.mxu0 0.0
        %312 = vmatpush.xpose.msra.mxu0 0.0
        %313 = vmatpush.xpose.msra.mxu0 0.0
        %314 = vmatpush.xpose.msra.mxu0 0.0
        %v315 = vand.u32 %v244, 4294901760
        %v316 = vsub.f32 %v244, %v315
        %317 = vmatpush.xpose.msra.mxu0 %v316
        %v318 = vand.u32 %v238, 4294901760
        %v319 = vsub.f32 %v238, %v318
        %320 = vmatmul.f32.gmra.mxu0 %v319
        %v321 = vpop.f32.mrf.mxu0
        %v322 = vadd.f32 %v298, %v321
        %323 = vdwg.mxu0
        %324 = vmatpush.xpose.msra.mxu0 0.0
        %325 = vmatpush.xpose.msra.mxu0 0.0
        %326 = vmatpush.xpose.msra.mxu0 0.0
        %327 = vmatpush.xpose.msra.mxu0 0.0
        %328 = vmatpush.xpose.msra.mxu0 0.0
        %329 = vmatpush.xpose.msra.mxu0 0.0
        %330 = vmatpush.xpose.msra.mxu0 0.0
        %331 = vmatpush.xpose.msra.mxu0 0.0
        %332 = vmatpush.xpose.msra.mxu0 0.0
        %333 = vmatpush.xpose.msra.mxu0 0.0
        %334 = vmatpush.xpose.msra.mxu0 0.0
        %335 = vmatpush.xpose.msra.mxu0 0.0
        %336 = vmatpush.xpose.msra.mxu0 0.0
        %337 = vmatpush.xpose.msra.mxu0 0.0
        %338 = vmatpush.xpose.msra.mxu0 0.0
        %v339 = vand.u32 %v244, 4294901760
        %340 = vmatpush.xpose.msra.mxu0 %v339
        %v341 = vand.u32 %v238, 4294901760
        %v342 = vsub.f32 %v238, %v341
        %v343 = vand.u32 %v342, 4294901760
        %344 = vmatmul.f32.gmra.mxu0 %v343
        %v345 = vpop.f32.mrf.mxu0
        %v346 = vadd.f32 %v322, %v345
        %347 = vdwg.mxu0
        %348 = vmatpush.xpose.msra.mxu0 0.0
        %349 = vmatpush.xpose.msra.mxu0 0.0
        %350 = vmatpush.xpose.msra.mxu0 0.0
        %351 = vmatpush.xpose.msra.mxu0 0.0
        %352 = vmatpush.xpose.msra.mxu0 0.0
        %353 = vmatpush.xpose.msra.mxu0 0.0
        %354 = vmatpush.xpose.msra.mxu0 0.0
        %355 = vmatpush.xpose.msra.mxu0 0.0
        %356 = vmatpush.xpose.msra.mxu0 0.0
        %357 = vmatpush.xpose.msra.mxu0 0.0
        %358 = vmatpush.xpose.msra.mxu0 0.0
        %359 = vmatpush.xpose.msra.mxu0 0.0
        %360 = vmatpush.xpose.msra.mxu0 0.0
        %361 = vmatpush.xpose.msra.mxu0 0.0
        %362 = vmatpush.xpose.msra.mxu0 0.0
        %v363 = vand.u32 %v244, 4294901760
        %v364 = vsub.f32 %v244, %v363
        %v365 = vand.u32 %v364, 4294901760
        %366 = vmatpush.xpose.msra.mxu0 %v365
        %v367 = vand.u32 %v238, 4294901760
        %368 = vmatmul.f32.gmra.mxu0 %v367
        %v369 = vpop.f32.mrf.mxu0
        %v370 = vadd.f32 %v346, %v369
        %371 = vdwg.mxu0
        %372 = vmatpush.xpose.msra.mxu0 0.0
        %373 = vmatpush.xpose.msra.mxu0 0.0
        %374 = vmatpush.xpose.msra.mxu0 0.0
        %375 = vmatpush.xpose.msra.mxu0 0.0
        %376 = vmatpush.xpose.msra.mxu0 0.0
        %377 = vmatpush.xpose.msra.mxu0 0.0
        %378 = vmatpush.xpose.msra.mxu0 0.0
        %379 = vmatpush.xpose.msra.mxu0 0.0
        %380 = vmatpush.xpose.msra.mxu0 0.0
        %381 = vmatpush.xpose.msra.mxu0 0.0
        %382 = vmatpush.xpose.msra.mxu0 0.0
        %383 = vmatpush.xpose.msra.mxu0 0.0
        %384 = vmatpush.xpose.msra.mxu0 0.0
        %385 = vmatpush.xpose.msra.mxu0 0.0
        %386 = vmatpush.xpose.msra.mxu0 0.0
        %v387 = vand.u32 %v244, 4294901760
        %388 = vmatpush.xpose.msra.mxu0 %v387
        %v389 = vand.u32 %v238, 4294901760
        %390 = vmatmul.f32.gmra.mxu0 %v389
        %v391 = vpop.f32.mrf.mxu0
        %v392 = vadd.f32 %v370, %v391
        %393 = vdwg.mxu0
        %394 = vmatpush.xpose.msra.mxu0 0.0
        %395 = vmatpush.xpose.msra.mxu0 0.0
        %396 = vmatpush.xpose.msra.mxu0 0.0
        %397 = vmatpush.xpose.msra.mxu0 0.0
        %398 = vmatpush.xpose.msra.mxu0 0.0
        %399 = vmatpush.xpose.msra.mxu0 0.0
        %400 = vmatpush.xpose.msra.mxu0 0.0
        %401 = vmatpush.xpose.msra.mxu0 0.0
        %402 = vmatpush.xpose.msra.mxu0 0.0
        %403 = vmatpush.xpose.msra.mxu0 0.0
        %404 = vmatpush.xpose.msra.mxu0 0.0
        %405 = vmatpush.xpose.msra.mxu0 0.0
        %406 = vmatpush.xpose.msra.mxu0 0.0
        %407 = vmatpush.xpose.msra.mxu0 0.0
        %408 = vmatpush.xpose.msra.mxu0 0.0
        %v409 = vand.u32 %v245, 4294901760
        %410 = vmatpush.xpose.msra.mxu0 %v409
        %v411 = vand.u32 %v239, 4294901760
        %v412 = vsub.f32 %v239, %v411
        %v413 = vand.u32 %v412, 4294901760
        %v414 = vsub.f32 %v412, %v413
        %v415 = vand.u32 %v414, 4294901760
        %416 = vmatmul.f32.gmra.mxu0 %v415
        %v417 = vpop.f32.mrf.mxu0
        %v418 = vadd.f32 %v392, %v417
        %419 = vdwg.mxu0
        %420 = vmatpush.xpose.msra.mxu0 0.0
        %421 = vmatpush.xpose.msra.mxu0 0.0
        %422 = vmatpush.xpose.msra.mxu0 0.0
        %423 = vmatpush.xpose.msra.mxu0 0.0
        %424 = vmatpush.xpose.msra.mxu0 0.0
        %425 = vmatpush.xpose.msra.mxu0 0.0
        %426 = vmatpush.xpose.msra.mxu0 0.0
        %427 = vmatpush.xpose.msra.mxu0 0.0
        %428 = vmatpush.xpose.msra.mxu0 0.0
        %429 = vmatpush.xpose.msra.mxu0 0.0
        %430 = vmatpush.xpose.msra.mxu0 0.0
        %431 = vmatpush.xpose.msra.mxu0 0.0
        %432 = vmatpush.xpose.msra.mxu0 0.0
        %433 = vmatpush.xpose.msra.mxu0 0.0
        %434 = vmatpush.xpose.msra.mxu0 0.0
        %v435 = vand.u32 %v245, 4294901760
        %v436 = vsub.f32 %v245, %v435
        %v437 = vand.u32 %v436, 4294901760
        %v438 = vsub.f32 %v436, %v437
        %v439 = vand.u32 %v438, 4294901760
        %440 = vmatpush.xpose.msra.mxu0 %v439
        %v441 = vand.u32 %v239, 4294901760
        %442 = vmatmul.f32.gmra.mxu0 %v441
        %v443 = vpop.f32.mrf.mxu0
        %v444 = vadd.f32 %v418, %v443
        %445 = vdwg.mxu0
        %446 = vmatpush.xpose.msra.mxu0 0.0
        %447 = vmatpush.xpose.msra.mxu0 0.0
        %448 = vmatpush.xpose.msra.mxu0 0.0
        %449 = vmatpush.xpose.msra.mxu0 0.0
        %450 = vmatpush.xpose.msra.mxu0 0.0
        %451 = vmatpush.xpose.msra.mxu0 0.0
        %452 = vmatpush.xpose.msra.mxu0 0.0
        %453 = vmatpush.xpose.msra.mxu0 0.0
        %454 = vmatpush.xpose.msra.mxu0 0.0
        %455 = vmatpush.xpose.msra.mxu0 0.0
        %456 = vmatpush.xpose.msra.mxu0 0.0
        %457 = vmatpush.xpose.msra.mxu0 0.0
        %458 = vmatpush.xpose.msra.mxu0 0.0
        %459 = vmatpush.xpose.msra.mxu0 0.0
        %460 = vmatpush.xpose.msra.mxu0 0.0
        %v461 = vand.u32 %v245, 4294901760
        %v462 = vsub.f32 %v245, %v461
        %463 = vmatpush.xpose.msra.mxu0 %v462
        %v464 = vand.u32 %v239, 4294901760
        %v465 = vsub.f32 %v239, %v464
        %466 = vmatmul.f32.gmra.mxu0 %v465
        %v467 = vpop.f32.mrf.mxu0
        %v468 = vadd.f32 %v444, %v467
        %469 = vdwg.mxu0
        %470 = vmatpush.xpose.msra.mxu0 0.0
        %471 = vmatpush.xpose.msra.mxu0 0.0
        %472 = vmatpush.xpose.msra.mxu0 0.0
        %473 = vmatpush.xpose.msra.mxu0 0.0
        %474 = vmatpush.xpose.msra.mxu0 0.0
        %475 = vmatpush.xpose.msra.mxu0 0.0
        %476 = vmatpush.xpose.msra.mxu0 0.0
        %477 = vmatpush.xpose.msra.mxu0 0.0
        %478 = vmatpush.xpose.msra.mxu0 0.0
        %479 = vmatpush.xpose.msra.mxu0 0.0
        %480 = vmatpush.xpose.msra.mxu0 0.0
        %481 = vmatpush.xpose.msra.mxu0 0.0
        %482 = vmatpush.xpose.msra.mxu0 0.0
        %483 = vmatpush.xpose.msra.mxu0 0.0
        %484 = vmatpush.xpose.msra.mxu0 0.0
        %v485 = vand.u32 %v245, 4294901760
        %486 = vmatpush.xpose.msra.mxu0 %v485
        %v487 = vand.u32 %v239, 4294901760
        %v488 = vsub.f32 %v239, %v487
        %v489 = vand.u32 %v488, 4294901760
        %490 = vmatmul.f32.gmra.mxu0 %v489
        %v491 = vpop.f32.mrf.mxu0
        %v492 = vadd.f32 %v468, %v491
        %493 = vdwg.mxu0
        %494 = vmatpush.xpose.msra.mxu0 0.0
        %495 = vmatpush.xpose.msra.mxu0 0.0
        %496 = vmatpush.xpose.msra.mxu0 0.0
        %497 = vmatpush.xpose.msra.mxu0 0.0
        %498 = vmatpush.xpose.msra.mxu0 0.0
        %499 = vmatpush.xpose.msra.mxu0 0.0
        %500 = vmatpush.xpose.msra.mxu0 0.0
        %501 = vmatpush.xpose.msra.mxu0 0.0
        %502 = vmatpush.xpose.msra.mxu0 0.0
        %503 = vmatpush.xpose.msra.mxu0 0.0
        %504 = vmatpush.xpose.msra.mxu0 0.0
        %505 = vmatpush.xpose.msra.mxu0 0.0
        %506 = vmatpush.xpose.msra.mxu0 0.0
        %507 = vmatpush.xpose.msra.mxu0 0.0
        %508 = vmatpush.xpose.msra.mxu0 0.0
        %v509 = vand.u32 %v245, 4294901760
        %v510 = vsub.f32 %v245, %v509
        %v511 = vand.u32 %v510, 4294901760
        %512 = vmatpush.xpose.msra.mxu0 %v511
        %v513 = vand.u32 %v239, 4294901760
        %514 = vmatmul.f32.gmra.mxu0 %v513
        %v515 = vpop.f32.mrf.mxu0
        %v516 = vadd.f32 %v492, %v515
        %517 = vdwg.mxu0
        %518 = vmatpush.xpose.msra.mxu0 0.0
        %519 = vmatpush.xpose.msra.mxu0 0.0
        %520 = vmatpush.xpose.msra.mxu0 0.0
        %521 = vmatpush.xpose.msra.mxu0 0.0
        %522 = vmatpush.xpose.msra.mxu0 0.0
        %523 = vmatpush.xpose.msra.mxu0 0.0
        %524 = vmatpush.xpose.msra.mxu0 0.0
        %525 = vmatpush.xpose.msra.mxu0 0.0
        %526 = vmatpush.xpose.msra.mxu0 0.0
        %527 = vmatpush.xpose.msra.mxu0 0.0
        %528 = vmatpush.xpose.msra.mxu0 0.0
        %529 = vmatpush.xpose.msra.mxu0 0.0
        %530 = vmatpush.xpose.msra.mxu0 0.0
        %531 = vmatpush.xpose.msra.mxu0 0.0
        %532 = vmatpush.xpose.msra.mxu0 0.0
        %v533 = vand.u32 %v245, 4294901760
        %534 = vmatpush.xpose.msra.mxu0 %v533
        %v535 = vand.u32 %v239, 4294901760
        %536 = vmatmul.f32.gmra.mxu0 %v535
        %v537 = vpop.f32.mrf.mxu0
        %v538 = vadd.f32 %v516, %v537
        %539 = vdwg.mxu0
        %v540 = vadd.f32 %v235, %v538
        %vm541 = vcmask 27648
        %542 = vst.msk [vmem:[#allocation2] sm:$0xf] %vm541, %v540
        %v543 = vld [vmem:[#allocation3] sm:$0xf]
        %v544 = vmul.f32 %v234, %v234
        %545 = vst [vmem:[#allocation1] ss:$2 sm:$0xff] %v233
        %v546 = vld.sshfl [vmem:[#allocation1] sm:$0xff pattern:$0x75316420]
        %v547 = vld.sshfl [vmem:[#allocation1 + $0x8] sm:$0xff pattern:$0x75316420]
        %551 = vst [vmem:[#allocation1] ss:$2 sm:$0xff] %v544
        %v552 = vld.sshfl [vmem:[#allocation1] sm:$0xff pattern:$0x75316420]
        %v553 = vld.sshfl [vmem:[#allocation1 + $0x8] sm:$0xff pattern:$0x75316420]
        %556 = vmatpush.xpose.msra.mxu0 0.0
        %557 = vmatpush.xpose.msra.mxu0 0.0
        %558 = vmatpush.xpose.msra.mxu0 0.0
        %559 = vmatpush.xpose.msra.mxu0 0.0
        %560 = vmatpush.xpose.msra.mxu0 0.0
        %561 = vmatpush.xpose.msra.mxu0 0.0
        %562 = vmatpush.xpose.msra.mxu0 0.0
        %563 = vmatpush.xpose.msra.mxu0 0.0
        %564 = vmatpush.xpose.msra.mxu0 0.0
        %565 = vmatpush.xpose.msra.mxu0 0.0
        %566 = vmatpush.xpose.msra.mxu0 0.0
        %567 = vmatpush.xpose.msra.mxu0 0.0
        %568 = vmatpush.xpose.msra.mxu0 0.0
        %569 = vmatpush.xpose.msra.mxu0 0.0
        %570 = vmatpush.xpose.msra.mxu0 0.0
        %v571 = vand.u32 %v552, 4294901760
        %572 = vmatpush.xpose.msra.mxu0 %v571
        %v573 = vand.u32 %v546, 4294901760
        %v574 = vsub.f32 %v546, %v573
        %v575 = vand.u32 %v574, 4294901760
        %v576 = vsub.f32 %v574, %v575
        %v577 = vand.u32 %v576, 4294901760
        %578 = vmatmul.f32.gmra.mxu0 %v577
        %v579 = vpop.f32.mrf.mxu0
        %v580 = vadd.f32 0.0, %v579
        %581 = vdwg.mxu0
        %582 = vmatpush.xpose.msra.mxu0 0.0
        %583 = vmatpush.xpose.msra.mxu0 0.0
        %584 = vmatpush.xpose.msra.mxu0 0.0
        %585 = vmatpush.xpose.msra.mxu0 0.0
        %586 = vmatpush.xpose.msra.mxu0 0.0
        %587 = vmatpush.xpose.msra.mxu0 0.0
        %588 = vmatpush.xpose.msra.mxu0 0.0
        %589 = vmatpush.xpose.msra.mxu0 0.0
        %590 = vmatpush.xpose.msra.mxu0 0.0
        %591 = vmatpush.xpose.msra.mxu0 0.0
        %592 = vmatpush.xpose.msra.mxu0 0.0
        %593 = vmatpush.xpose.msra.mxu0 0.0
        %594 = vmatpush.xpose.msra.mxu0 0.0
        %595 = vmatpush.xpose.msra.mxu0 0.0
        %596 = vmatpush.xpose.msra.mxu0 0.0
        %v597 = vand.u32 %v552, 4294901760
        %v598 = vsub.f32 %v552, %v597
        %v599 = vand.u32 %v598, 4294901760
        %v600 = vsub.f32 %v598, %v599
        %v601 = vand.u32 %v600, 4294901760
        %602 = vmatpush.xpose.msra.mxu0 %v601
        %v603 = vand.u32 %v546, 4294901760
        %604 = vmatmul.f32.gmra.mxu0 %v603
        %v605 = vpop.f32.mrf.mxu0
        %v606 = vadd.f32 %v580, %v605
        %607 = vdwg.mxu0
        %608 = vmatpush.xpose.msra.mxu0 0.0
        %609 = vmatpush.xpose.msra.mxu0 0.0
        %610 = vmatpush.xpose.msra.mxu0 0.0
        %611 = vmatpush.xpose.msra.mxu0 0.0
        %612 = vmatpush.xpose.msra.mxu0 0.0
        %613 = vmatpush.xpose.msra.mxu0 0.0
        %614 = vmatpush.xpose.msra.mxu0 0.0
        %615 = vmatpush.xpose.msra.mxu0 0.0
        %616 = vmatpush.xpose.msra.mxu0 0.0
        %617 = vmatpush.xpose.msra.mxu0 0.0
        %618 = vmatpush.xpose.msra.mxu0 0.0
        %619 = vmatpush.xpose.msra.mxu0 0.0
        %620 = vmatpush.xpose.msra.mxu0 0.0
        %621 = vmatpush.xpose.msra.mxu0 0.0
        %622 = vmatpush.xpose.msra.mxu0 0.0
        %v623 = vand.u32 %v552, 4294901760
        %v624 = vsub.f32 %v552, %v623
        %625 = vmatpush.xpose.msra.mxu0 %v624
        %v626 = vand.u32 %v546, 4294901760
        %v627 = vsub.f32 %v546, %v626
        %628 = vmatmul.f32.gmra.mxu0 %v627
        %v629 = vpop.f32.mrf.mxu0
        %v630 = vadd.f32 %v606, %v629
        %631 = vdwg.mxu0
        %632 = vmatpush.xpose.msra.mxu0 0.0
        %633 = vmatpush.xpose.msra.mxu0 0.0
        %634 = vmatpush.xpose.msra.mxu0 0.0
        %635 = vmatpush.xpose.msra.mxu0 0.0
        %636 = vmatpush.xpose.msra.mxu0 0.0
        %637 = vmatpush.xpose.msra.mxu0 0.0
        %638 = vmatpush.xpose.msra.mxu0 0.0
        %639 = vmatpush.xpose.msra.mxu0 0.0
        %640 = vmatpush.xpose.msra.mxu0 0.0
        %641 = vmatpush.xpose.msra.mxu0 0.0
        %642 = vmatpush.xpose.msra.mxu0 0.0
        %643 = vmatpush.xpose.msra.mxu0 0.0
        %644 = vmatpush.xpose.msra.mxu0 0.0
        %645 = vmatpush.xpose.msra.mxu0 0.0
        %646 = vmatpush.xpose.msra.mxu0 0.0
        %v647 = vand.u32 %v552, 4294901760
        %648 = vmatpush.xpose.msra.mxu0 %v647
        %v649 = vand.u32 %v546, 4294901760
        %v650 = vsub.f32 %v546, %v649
        %v651 = vand.u32 %v650, 4294901760
        %652 = vmatmul.f32.gmra.mxu0 %v651
        %v653 = vpop.f32.mrf.mxu0
        %v654 = vadd.f32 %v630, %v653
        %655 = vdwg.mxu0
        %656 = vmatpush.xpose.msra.mxu0 0.0
        %657 = vmatpush.xpose.msra.mxu0 0.0
        %658 = vmatpush.xpose.msra.mxu0 0.0
        %659 = vmatpush.xpose.msra.mxu0 0.0
        %660 = vmatpush.xpose.msra.mxu0 0.0
        %661 = vmatpush.xpose.msra.mxu0 0.0
        %662 = vmatpush.xpose.msra.mxu0 0.0
        %663 = vmatpush.xpose.msra.mxu0 0.0
        %664 = vmatpush.xpose.msra.mxu0 0.0
        %665 = vmatpush.xpose.msra.mxu0 0.0
        %666 = vmatpush.xpose.msra.mxu0 0.0
        %667 = vmatpush.xpose.msra.mxu0 0.0
        %668 = vmatpush.xpose.msra.mxu0 0.0
        %669 = vmatpush.xpose.msra.mxu0 0.0
        %670 = vmatpush.xpose.msra.mxu0 0.0
        %v671 = vand.u32 %v552, 4294901760
        %v672 = vsub.f32 %v552, %v671
        %v673 = vand.u32 %v672, 4294901760
        %674 = vmatpush.xpose.msra.mxu0 %v673
        %v675 = vand.u32 %v546, 4294901760
        %676 = vmatmul.f32.gmra.mxu0 %v675
        %v677 = vpop.f32.mrf.mxu0
        %v678 = vadd.f32 %v654, %v677
        %679 = vdwg.mxu0
        %680 = vmatpush.xpose.msra.mxu0 0.0
        %681 = vmatpush.xpose.msra.mxu0 0.0
        %682 = vmatpush.xpose.msra.mxu0 0.0
        %683 = vmatpush.xpose.msra.mxu0 0.0
        %684 = vmatpush.xpose.msra.mxu0 0.0
        %685 = vmatpush.xpose.msra.mxu0 0.0
        %686 = vmatpush.xpose.msra.mxu0 0.0
        %687 = vmatpush.xpose.msra.mxu0 0.0
        %688 = vmatpush.xpose.msra.mxu0 0.0
        %689 = vmatpush.xpose.msra.mxu0 0.0
        %690 = vmatpush.xpose.msra.mxu0 0.0
        %691 = vmatpush.xpose.msra.mxu0 0.0
        %692 = vmatpush.xpose.msra.mxu0 0.0
        %693 = vmatpush.xpose.msra.mxu0 0.0
        %694 = vmatpush.xpose.msra.mxu0 0.0
        %v695 = vand.u32 %v552, 4294901760
        %696 = vmatpush.xpose.msra.mxu0 %v695
        %v697 = vand.u32 %v546, 4294901760
        %698 = vmatmul.f32.gmra.mxu0 %v697
        %v699 = vpop.f32.mrf.mxu0
        %v700 = vadd.f32 %v678, %v699
        %701 = vdwg.mxu0
        %702 = vmatpush.xpose.msra.mxu0 0.0
        %703 = vmatpush.xpose.msra.mxu0 0.0
        %704 = vmatpush.xpose.msra.mxu0 0.0
        %705 = vmatpush.xpose.msra.mxu0 0.0
        %706 = vmatpush.xpose.msra.mxu0 0.0
        %707 = vmatpush.xpose.msra.mxu0 0.0
        %708 = vmatpush.xpose.msra.mxu0 0.0
        %709 = vmatpush.xpose.msra.mxu0 0.0
        %710 = vmatpush.xpose.msra.mxu0 0.0
        %711 = vmatpush.xpose.msra.mxu0 0.0
        %712 = vmatpush.xpose.msra.mxu0 0.0
        %713 = vmatpush.xpose.msra.mxu0 0.0
        %714 = vmatpush.xpose.msra.mxu0 0.0
        %715 = vmatpush.xpose.msra.mxu0 0.0
        %716 = vmatpush.xpose.msra.mxu0 0.0
        %v717 = vand.u32 %v553, 4294901760
        %718 = vmatpush.xpose.msra.mxu0 %v717
        %v719 = vand.u32 %v547, 4294901760
        %v720 = vsub.f32 %v547, %v719
        %v721 = vand.u32 %v720, 4294901760
        %v722 = vsub.f32 %v720, %v721
        %v723 = vand.u32 %v722, 4294901760
        %724 = vmatmul.f32.gmra.mxu0 %v723
        %v725 = vpop.f32.mrf.mxu0
        %v726 = vadd.f32 %v700, %v725
        %727 = vdwg.mxu0
        %728 = vmatpush.xpose.msra.mxu0 0.0
        %729 = vmatpush.xpose.msra.mxu0 0.0
        %730 = vmatpush.xpose.msra.mxu0 0.0
        %731 = vmatpush.xpose.msra.mxu0 0.0
        %732 = vmatpush.xpose.msra.mxu0 0.0
        %733 = vmatpush.xpose.msra.mxu0 0.0
        %734 = vmatpush.xpose.msra.mxu0 0.0
        %735 = vmatpush.xpose.msra.mxu0 0.0
        %736 = vmatpush.xpose.msra.mxu0 0.0
        %737 = vmatpush.xpose.msra.mxu0 0.0
        %738 = vmatpush.xpose.msra.mxu0 0.0
        %739 = vmatpush.xpose.msra.mxu0 0.0
        %740 = vmatpush.xpose.msra.mxu0 0.0
        %741 = vmatpush.xpose.msra.mxu0 0.0
        %742 = vmatpush.xpose.msra.mxu0 0.0
        %v743 = vand.u32 %v553, 4294901760
        %v744 = vsub.f32 %v553, %v743
        %v745 = vand.u32 %v744, 4294901760
        %v746 = vsub.f32 %v744, %v745
        %v747 = vand.u32 %v746, 4294901760
        %748 = vmatpush.xpose.msra.mxu0 %v747
        %v749 = vand.u32 %v547, 4294901760
        %750 = vmatmul.f32.gmra.mxu0 %v749
        %v751 = vpop.f32.mrf.mxu0
        %v752 = vadd.f32 %v726, %v751
        %753 = vdwg.mxu0
        %754 = vmatpush.xpose.msra.mxu0 0.0
        %755 = vmatpush.xpose.msra.mxu0 0.0
        %756 = vmatpush.xpose.msra.mxu0 0.0
        %757 = vmatpush.xpose.msra.mxu0 0.0
        %758 = vmatpush.xpose.msra.mxu0 0.0
        %759 = vmatpush.xpose.msra.mxu0 0.0
        %760 = vmatpush.xpose.msra.mxu0 0.0
        %761 = vmatpush.xpose.msra.mxu0 0.0
        %762 = vmatpush.xpose.msra.mxu0 0.0
        %763 = vmatpush.xpose.msra.mxu0 0.0
        %764 = vmatpush.xpose.msra.mxu0 0.0
        %765 = vmatpush.xpose.msra.mxu0 0.0
        %766 = vmatpush.xpose.msra.mxu0 0.0
        %767 = vmatpush.xpose.msra.mxu0 0.0
        %768 = vmatpush.xpose.msra.mxu0 0.0
        %v769 = vand.u32 %v553, 4294901760
        %v770 = vsub.f32 %v553, %v769
        %771 = vmatpush.xpose.msra.mxu0 %v770
        %v772 = vand.u32 %v547, 4294901760
        %v773 = vsub.f32 %v547, %v772
        %774 = vmatmul.f32.gmra.mxu0 %v773
        %v775 = vpop.f32.mrf.mxu0
        %v776 = vadd.f32 %v752, %v775
        %777 = vdwg.mxu0
        %778 = vmatpush.xpose.msra.mxu0 0.0
        %779 = vmatpush.xpose.msra.mxu0 0.0
        %780 = vmatpush.xpose.msra.mxu0 0.0
        %781 = vmatpush.xpose.msra.mxu0 0.0
        %782 = vmatpush.xpose.msra.mxu0 0.0
        %783 = vmatpush.xpose.msra.mxu0 0.0
        %784 = vmatpush.xpose.msra.mxu0 0.0
        %785 = vmatpush.xpose.msra.mxu0 0.0
        %786 = vmatpush.xpose.msra.mxu0 0.0
        %787 = vmatpush.xpose.msra.mxu0 0.0
        %788 = vmatpush.xpose.msra.mxu0 0.0
        %789 = vmatpush.xpose.msra.mxu0 0.0
        %790 = vmatpush.xpose.msra.mxu0 0.0
        %791 = vmatpush.xpose.msra.mxu0 0.0
        %792 = vmatpush.xpose.msra.mxu0 0.0
        %v793 = vand.u32 %v553, 4294901760
        %794 = vmatpush.xpose.msra.mxu0 %v793
        %v795 = vand.u32 %v547, 4294901760
        %v796 = vsub.f32 %v547, %v795
        %v797 = vand.u32 %v796, 4294901760
        %798 = vmatmul.f32.gmra.mxu0 %v797
        %v799 = vpop.f32.mrf.mxu0
        %v800 = vadd.f32 %v776, %v799
        %801 = vdwg.mxu0
        %802 = vmatpush.xpose.msra.mxu0 0.0
        %803 = vmatpush.xpose.msra.mxu0 0.0
        %804 = vmatpush.xpose.msra.mxu0 0.0
        %805 = vmatpush.xpose.msra.mxu0 0.0
        %806 = vmatpush.xpose.msra.mxu0 0.0
        %807 = vmatpush.xpose.msra.mxu0 0.0
        %808 = vmatpush.xpose.msra.mxu0 0.0
        %809 = vmatpush.xpose.msra.mxu0 0.0
        %810 = vmatpush.xpose.msra.mxu0 0.0
        %811 = vmatpush.xpose.msra.mxu0 0.0
        %812 = vmatpush.xpose.msra.mxu0 0.0
        %813 = vmatpush.xpose.msra.mxu0 0.0
        %814 = vmatpush.xpose.msra.mxu0 0.0
        %815 = vmatpush.xpose.msra.mxu0 0.0
        %816 = vmatpush.xpose.msra.mxu0 0.0
        %v817 = vand.u32 %v553, 4294901760
        %v818 = vsub.f32 %v553, %v817
        %v819 = vand.u32 %v818, 4294901760
        %820 = vmatpush.xpose.msra.mxu0 %v819
        %v821 = vand.u32 %v547, 4294901760
        %822 = vmatmul.f32.gmra.mxu0 %v821
        %v823 = vpop.f32.mrf.mxu0
        %v824 = vadd.f32 %v800, %v823
        %825 = vdwg.mxu0
        %826 = vmatpush.xpose.msra.mxu0 0.0
        %827 = vmatpush.xpose.msra.mxu0 0.0
        %828 = vmatpush.xpose.msra.mxu0 0.0
        %829 = vmatpush.xpose.msra.mxu0 0.0
        %830 = vmatpush.xpose.msra.mxu0 0.0
        %831 = vmatpush.xpose.msra.mxu0 0.0
        %832 = vmatpush.xpose.msra.mxu0 0.0
        %833 = vmatpush.xpose.msra.mxu0 0.0
        %834 = vmatpush.xpose.msra.mxu0 0.0
        %835 = vmatpush.xpose.msra.mxu0 0.0
        %836 = vmatpush.xpose.msra.mxu0 0.0
        %837 = vmatpush.xpose.msra.mxu0 0.0
        %838 = vmatpush.xpose.msra.mxu0 0.0
        %839 = vmatpush.xpose.msra.mxu0 0.0
        %840 = vmatpush.xpose.msra.mxu0 0.0
        %v841 = vand.u32 %v553, 4294901760
        %842 = vmatpush.xpose.msra.mxu0 %v841
        %v843 = vand.u32 %v547, 4294901760
        %844 = vmatmul.f32.gmra.mxu0 %v843
        %v845 = vpop.f32.mrf.mxu0
        %v846 = vadd.f32 %v824, %v845
        %847 = vdwg.mxu0
        %v848 = vadd.f32 %v543, %v846
        %849 = vst.msk [vmem:[#allocation3] sm:$0xf] %vm541, %v848
        %v850 = vld [vmem:[#allocation4] sm:$0xf]
        %851 = vst [vmem:[#allocation1] ss:$2 sm:$0xff] %v233
        %v852 = vld.sshfl [vmem:[#allocation1] sm:$0xff pattern:$0x75316420]
        %v853 = vld.sshfl [vmem:[#allocation1 + $0x8] sm:$0xff pattern:$0x75316420]
        %vm856 = vcmask 1043456
        %v857 = vsel %vm856, %v852, 0.0
        %v858 = vsel %vm856, %v853, 0.0
        %v859 = vadd.f32 %v857, %v858
        %860 = vadd.xlane.f32.xlu0 %v859
        %v861 = vpop.xlane.xlu0 %860
        %v862 = vadd.f32 %v850, %v861
        %vm863 = vcmask 3072
        %864 = vst.msk [vmem:[#allocation4] sm:$0xf] %vm863, %v862
        // Predicated region
        $region41: #{tpu_custom_call.1} parent=27 // pred_check
          %p865 = pneg %p224
        $region42: #{tpu_custom_call.1} parent=27 // pred_check_branch
          %867 = sbr.rel (%p865) target = $region44
        $region43: #{tpu_custom_call.1} parent=27 // pred_region
          %v868 = vld [vmem:[#allocation4] sm:$0xf]
          %v869 = vld [vmem:[#allocation2] sm:$0xf]
          %v870 = vld [vmem:[#allocation3] sm:$0xf]
          %v871 = vmul.f32 %v869, %v869
          %873 = vset.pattern.permute.xlu0 0
          %874 = vperm.xlu0 %873, %v868
          %v875 = vpop.permute.xlu0 %874
          %v877 = vrcp.pop %v875
          %v878 = vmul.f32 %v875, %v877
          %v879 = vsub.f32 1.0, %v878
          %v880 = vmul.f32 %v877, %v879
          %v881 = vadd.f32 %v877, %v880
          %vm882 = vweird.f32 %v875
          %vm883 = vweird.f32 %v877
          %vm884 = vmor %vm882, %vm883
          %v885 = vsel %vm884, %v877, %v881
          %v886 = vand.u32 2147483647, %v875
          %vm887 = vcmp.eq.f32.partialorder %v886, 8.507059e+37
          %v888 = vand.u32 %v875, 2147483648
          %v889 = vor.u32 1.1754944e-38, %v888
          %v890 = vsel %vm887, %v889, %v885
          %v891 = vmul.f32 %v871, %v890
          %v892 = vsub.f32 %v870, %v891
          %v893 = vsel %vm541, %v892, 0.0
          %894 = vadd.xlane.f32.xlu0 %v893
          %v895 = vpop.xlane.xlu0 %894
          %v896 = vrot.slane %v895, 4
          %v897 = vadd.f32 %v895, %v896
          %v898 = vrot.slane %v897, 2
          %v899 = vadd.f32 %v897, %v898
          %v900 = vrot.slane %v899, 1
          %v901 = vadd.f32 %v899, %v900
          %s902 = vtos %v901
          %v903 = vstv %s902
          %904 = vst [vmem:[%s221] sm:$0xff] %v903
        $region44: #{tpu_custom_call.1} parent=27 // pred_fallthru
          _
        %s905 = sand.u32 %s98, 1
        %s906 = scalar_lea.sflag [#allocation7], %s905
        %s907 = sand.u32 %s98, 1
        %s908 = smul.addr %s907, 8
        %s909 = scalar_lea.vmem [#allocation10], %s908
        // Predicated region
        $region45: #{tpu_custom_call.1} parent=27 // pred_check
          %p910 = pneg %p108
        $region46: #{tpu_custom_call.1} parent=27 // pred_check_branch
          %912 = sbr.rel (%p910) target = $region48
        $region47: #{tpu_custom_call.1} parent=27 // pred_region
          %914 = vsyncadd %s906, 0
          %s915 = smul.addr %s26, 8
          %s916 = scalar_lea.hbm %s2, %s915
          %s918 = sshll.u32 %s909, 4
          %s919 = int_to_ptr.vmem [resolvable:$true] %s918
          %s920 = sshll.u32 %s916, 4
          %s921 = int_to_ptr.hbm [resolvable:$true] %s920
          %923 = dma.vmem_to_hbm [thread:$0]  %s919, 128, %s921, %s906
        $region48: #{tpu_custom_call.1} parent=27 // pred_fallthru
          _
      $region28: #{tpu_custom_call.1} parent=5 // pred_fallthru
        _
      %p924 = scmp.le.s32.totalorder 2, %s17
      // Predicated region
      $region49: #{tpu_custom_call.1} parent=5 // pred_check
        %p925 = pneg %p924
      $region50: #{tpu_custom_call.1} parent=5 // pred_check_branch
        %927 = sbr.rel (%p925) target = $region52
      $region51: #{tpu_custom_call.1} parent=5 // pred_region
        %s928 = ssub.s32 %s17, 2
        // Predicated region
        $region53: #{tpu_custom_call.1} parent=51 // pred_check
          %p929 = pneg %p114
        $region54: #{tpu_custom_call.1} parent=51 // pred_check_branch
          %931 = sbr.rel (%p929) target = $region56
        $region55: #{tpu_custom_call.1} parent=51 // pred_region
          %s932 = sand.u32 %s99, 1
          %s933 = scalar_lea.sflag [#allocation7], %s932
          %s934 = sand.u32 %s99, 1
          %s935 = smul.addr %s934, 8
          %s936 = scalar_lea.vmem [#allocation10], %s935
          %938 = dma.done %s933, 128
        $region56: #{tpu_custom_call.1} parent=51 // pred_fallthru
          _
      $region52: #{tpu_custom_call.1} parent=5 // pred_fallthru
        _
    $region6: #{tpu_custom_call.1} parent=1 // loop_footer
      %s21 = sadd.s32 1, %s17
    $region7: #{tpu_custom_call.1} parent=1 // loop_footer_branch
      %16 = sbr.rel target = $region3
    $region8: #{tpu_custom_call.1} parent=1 // loop_exit
      _
    %939 = vsyncpa [#allocation6], 1
    %s940 = scalar_lea.sflag [#allocation6], 1
    %941 = vsyncpa %s940, 1
    %942 = vsyncpa [#allocation9], 1
    %s943 = scalar_lea.sflag [#allocation9], 1
    %944 = vsyncpa %s943, 1
    %945 = vsyncpa [#allocation7], 1
    %s946 = scalar_lea.sflag [#allocation7], 1
    %947 = vsyncpa %s946, 1

</llo_original>
